<compile_context>
chip_gen: v7x
topology: tpu7x:2x2x1
jax: 0.10.0
libtpu: 0.0.40
codegen_flags: <defaults>
</compile_context>

<pallas_src>
import math

import jax
import jax.numpy as jnp
from jax.experimental import pallas as pl
from jax.experimental.pallas import tpu as pltpu

_LANE = 128      # TPU lane width (last-dim tile)
_SUBLANE = 8     # f32 sublane tile


def _round_up(x, m):
    return ((x + m - 1) // m) * m


def _mapping_kernel(z_ref, w_ref, b_ref, o_ref):
    # MXU matmul with f32 accumulation, then bias + LeakyReLU(0.2) on the VPU.
    y = jnp.dot(z_ref[...], w_ref[...], preferred_element_type=jnp.float32)
    y = y + b_ref[...]                       # (TM, N) + (1, N) broadcast
    y = jnp.where(y > 0, y, 0.2 * y)         # LeakyReLU(negative_slope=0.2)
    o_ref[...] = y.astype(o_ref.dtype)


def mapping_network(z, weight_t, bias, *, block_m=1024):
    """Forward of MappingNetwork.

    z:        (B, latent_dim)
    weight_t: (latent_dim, style_dim)   -- PyTorch weight, pre-transposed
    bias:     (style_dim,) or (1, style_dim)
    returns:  (B, style_dim)
    """
    B, latent_dim = z.shape
    k_in, style_dim = weight_t.shape
    assert k_in == latent_dim
    bias = bias.reshape(1, style_dim)        # tolerate 1-D bias

    # Contraction axis: full-dim block, never zero-padded (MXU handles short K).
    K = latent_dim
    # Output features: lane-pad to 128 only if needed (unmasked full-lane vst).
    N = style_dim if style_dim % _LANE == 0 else _round_up(style_dim, _LANE)

    # Adaptive batch tiling: bound dead-row padding to <8 per tile and give
    # v7x's two TensorCores at least 2 grid points when the batch can split.
    B8 = _round_up(B, _SUBLANE)
    min_tiles = 2 if B8 >= 2 * _SUBLANE else 1
    ntiles = max(pl.cdiv(B8, block_m), min_tiles)
    TM = _round_up(pl.cdiv(B8, ntiles), _SUBLANE)
    M = ntiles * TM

    f32 = jnp.float32
    # Pad only when actually required (each pad / slice is an extra HBM pass).
    z_p = z if M == B else jnp.zeros((M, K), z.dtype).at[:B, :].set(z)
    if N == style_dim:
        w_p = weight_t
        b_p = bias.astype(f32)
    else:
        w_p = jnp.zeros((K, N), weight_t.dtype).at[:, :style_dim].set(weight_t)
        b_p = jnp.zeros((1, N), f32).at[:, :style_dim].set(bias.astype(f32))

    bytes_accessed = (
        z_p.size * z_p.dtype.itemsize
        + w_p.size * w_p.dtype.itemsize
        + b_p.size * b_p.dtype.itemsize
        + M * N * z.dtype.itemsize
    )

    # Double-buffered VMEM footprint estimate; raise the scoped limit only when
    # v5e's 16 MiB default would be exceeded (cap at v7x's 64 MiB physical).
    itm = jnp.dtype(z.dtype).itemsize
    vmem_est = (2 * TM * K + 2 * TM * N + 2 * K * N) * itm + 2 * N * 4
    compiler_kwargs = dict(dimension_semantics=("parallel",))
    if vmem_est > 16 * 1024 * 1024:
        compiler_kwargs["vmem_limit_bytes"] = min(2 * vmem_est, 64 * 1024 * 1024)

    out = pl.pallas_call(
        _mapping_kernel,
        out_shape=jax.ShapeDtypeStruct((M, N), z.dtype),
        grid_spec=pltpu.PrefetchScalarGridSpec(
            num_scalar_prefetch=0,
            grid=(ntiles,),
            in_specs=[
                pl.BlockSpec((TM, K), lambda i: (i, 0)),   # z tile, pipelined
                pl.BlockSpec((K, N), lambda i: (0, 0)),    # weight, resident
                pl.BlockSpec((1, N), lambda i: (0, 0)),    # bias, resident
            ],
            out_specs=pl.BlockSpec((TM, N), lambda i: (i, 0)),
        ),
        compiler_params=pltpu.CompilerParams(**compiler_kwargs),
        cost_estimate=pl.CostEstimate(
            flops=2 * M * K * N,
            transcendentals=0,
            bytes_accessed=bytes_accessed),
    )(z_p, w_p, b_p)

    # Slice off padded rows/lanes only if we actually padded.
    if M == B and N == style_dim:
        return out
    return out[:B, :style_dim]


def init_params(key, latent_dim, style_dim):
    """Deterministic init mimicking nn.Linear default (uniform +/- 1/sqrt(fan_in))."""
    kw, kb = jax.random.split(key)
    bound = 1.0 / math.sqrt(latent_dim)
    # PyTorch weight is (style_dim, latent_dim); we store it transposed.
    weight_t = jax.random.uniform(
        kw, (latent_dim, style_dim), minval=-bound, maxval=bound,
        dtype=jnp.float32)
    bias = jax.random.uniform(
        kb, (1, style_dim), minval=-bound, maxval=bound, dtype=jnp.float32)
    return weight_t, bias


if __name__ == "__main__":
    latent_dim = 32
    style_dim = 32
    batch = 8

    key = jax.random.PRNGKey(0)
    kz, kp = jax.random.split(key)
    z = jax.random.normal(kz, (batch, latent_dim), dtype=jnp.float32)
    weight_t, bias = init_params(kp, latent_dim, style_dim)

    out = mapping_network(z, weight_t, bias)
    out = jax.block_until_ready(out)

    # Reference check in plain JAX (Linear + LeakyReLU(0.2)).
    ref = z @ weight_t + bias
    ref = jnp.where(ref > 0, ref, 0.2 * ref)
    assert out.shape == (batch, style_dim)
    assert jnp.allclose(out, ref, atol=1e-5, rtol=1e-5)

    # Also exercise an unaligned / multi-tile batch path to cover the adaptive
    # tiling + padding-skip logic.
    z2 = jax.random.normal(kz, (300, latent_dim), dtype=jnp.float32)
    out2 = jax.block_until_ready(mapping_network(z2, weight_t, bias))
    ref2 = z2 @ weight_t + bias
    ref2 = jnp.where(ref2 > 0, ref2, 0.2 * ref2)
    assert out2.shape == (300, style_dim)
    assert jnp.allclose(out2, ref2, atol=1e-5, rtol=1e-5)

    print("KERNEL_OK")
</pallas_src>

<mosaic_0001>
module attributes {stable_mosaic.version = 11 : i64} {
  func.func @_mapping_kernel(%arg0: i32, %arg1: memref<8x32xf32, #tpu.memory_space<vmem>>, %arg2: memref<32x128xf32, #tpu.memory_space<vmem>>, %arg3: memref<1x128xf32, #tpu.memory_space<vmem>>, %arg4: memref<8x128xf32, #tpu.memory_space<vmem>>) attributes {dimension_semantics = [#tpu.dimension_semantics<parallel>], iteration_bounds = array<i64: 1>, scalar_prefetch = 0 : i64, scratch_operands = 0 : i64, tpu.core_type = #tpu.core_type<tc>, window_params = [{transform_indices = @transform_0, window_bounds = array<i64: 8, 32>}, {pipeline_mode = #tpu.pipeline_mode<synchronous>, transform_indices = @transform_1, window_bounds = array<i64: 32, 128>}, {pipeline_mode = #tpu.pipeline_mode<synchronous>, transform_indices = @transform_2, window_bounds = array<i64: 1, 128>}, {transform_indices = @transform_3, window_bounds = array<i64: 8, 128>}]} {
    %c0 = arith.constant 0 : index
    %c0_0 = arith.constant 0 : index
    %0 = vector.load %arg1[%c0, %c0_0] : memref<8x32xf32, #tpu.memory_space<vmem>>, vector<8x32xf32>
    %c0_1 = arith.constant 0 : index
    %c0_2 = arith.constant 0 : index
    %1 = vector.load %arg2[%c0_1, %c0_2] : memref<32x128xf32, #tpu.memory_space<vmem>>, vector<32x128xf32>
    %cst = arith.constant dense<0.000000e+00> : vector<8x128xf32>
    %2 = tpu.matmul %0, %1, %cst {dimension_numbers = #tpu.dot_dimension_numbers<[1], [0], [0], [1], [0, 0, 1, 1], [], []>} : vector<8x32xf32>, vector<32x128xf32>, vector<8x128xf32> -> vector<8x128xf32>
    %c0_3 = arith.constant 0 : index
    %c0_4 = arith.constant 0 : index
    %3 = vector.load %arg3[%c0_3, %c0_4] : memref<1x128xf32, #tpu.memory_space<vmem>>, vector<1x128xf32>
    %4 = vector.broadcast %3 : vector<1x128xf32> to vector<8x128xf32>
    %5 = arith.addf %2, %4 : vector<8x128xf32>
    %cst_5 = arith.constant 0.000000e+00 : f32
    %6 = vector.broadcast %cst_5 : f32 to vector<8x128xf32>
    %7 = arith.cmpf ogt, %5, %6 : vector<8x128xf32>
    %cst_6 = arith.constant 2.000000e-01 : f32
    %8 = vector.broadcast %cst_6 : f32 to vector<8x128xf32>
    %9 = arith.mulf %8, %5 : vector<8x128xf32>
    %10 = arith.select %7, %5, %9 : vector<8x128xi1>, vector<8x128xf32>
    %c0_7 = arith.constant 0 : index
    %c0_8 = arith.constant 0 : index
    %11 = vector.load %arg4[%c0_7, %c0_8] : memref<8x128xf32, #tpu.memory_space<vmem>>, vector<8x128xf32>
    tpu.vector_store %arg4[%c0_7, %c0_8], %10 {strides = array<i32>} : memref<8x128xf32, #tpu.memory_space<vmem>>, vector<8x128xf32>,
    return
  }
  func.func @transform_0(%arg0: i32) -> (i32, i32) {
    %c0_i32 = arith.constant 0 : i32
    %c0_i32_0 = arith.constant 0 : i32
    return %arg0, %c0_i32 : i32, i32
  }
  func.func @transform_1(%arg0: i32) -> (i32, i32) {
    %c0_i32 = arith.constant 0 : i32
    %c0_i32_0 = arith.constant 0 : i32
    %c0_i32_1 = arith.constant 0 : i32
    return %c0_i32, %c0_i32_0 : i32, i32
  }
  func.func @transform_2(%arg0: i32) -> (i32, i32) {
    %c0_i32 = arith.constant 0 : i32
    %c0_i32_0 = arith.constant 0 : i32
    %c0_i32_1 = arith.constant 0 : i32
    return %c0_i32, %c0_i32_0 : i32, i32
  }
  func.func @transform_3(%arg0: i32) -> (i32, i32) {
    %c0_i32 = arith.constant 0 : i32
    %c0_i32_0 = arith.constant 0 : i32
    return %arg0, %c0_i32 : i32, i32
  }
}

</mosaic_0001>

<llo_original>
// kernel: tpu_custom_call.1
$region0: #{tpu_custom_call.1}
  #allocation0 [shape = 'u32[]', space=smem, size = 0x4, offset = 0x4, fixed_abs, tag = 'smem constant byte address 0x4 - core index']
  #allocation1 [shape = 'u32[144,128]{1,0:T(1,128)}', space=vmem, size = 0x12000, scoped, tag = 'internal scratch']
  %s0 = inlined_call_operand.hbm [shape: f32[8,32], index: 0, kind: input, shape index: {}]
  %s1 = inlined_call_operand.hbm [shape: f32[32,128], index: 1, kind: input, shape index: {}]
  %s2 = inlined_call_operand.vmem [shape: f32[1,128], index: 2, kind: input, shape index: {}]
  %s3 = inlined_call_operand.hbm [shape: f32[8,128], index: 3, kind: output, shape index: {}]
  %s4 = sld [smem:[#allocation0]]
  $region30: #{tpu_custom_call.1} parent=0
    _
  %s6 = ssub.s32 1, %s4
  %s7 = scalar_select 0, %s6, %s4
  $region1: #{tpu_custom_call.1} parent=0
    #allocation2 [shape = 'u8[4096]{0}', space=vmem, size = 0x1000, scoped, tag = 'input window, operand 0, single buffered']
    #allocation3 [shape = 's32[1]{0}', space=sflag, size = 0x4, scoped, tag = 'scoped memory for tpu_custom_call.1']
    #allocation4 [shape = 's32[1]{0}', space=sflag, size = 0x4, scoped, tag = 'scoped memory for tpu_custom_call.1']
    #allocation5 [shape = 'u8[16384]{0}', space=vmem, size = 0x4000, scoped, tag = 'input window, operand 1, single buffered']
    #allocation6 [shape = 's32[1]{0}', space=sflag, size = 0x4, scoped, tag = 'scoped memory for tpu_custom_call.1']
    #allocation7 [shape = 'u8[4096]{0}', space=vmem, size = 0x1000, scoped, tag = 'output window, operand 0, single buffered']
    %8 = vsyncpa [#allocation3], 0
    %9 = vsyncpa [#allocation6], 0
    %10 = vsyncpa [#allocation4], 0
    // Predicated region
    $region2: #{tpu_custom_call.1} parent=1 // pred_check
      _
    $region3: #{tpu_custom_call.1} parent=1 // pred_check_branch
      %12 = sbr.rel (0) target = $region5
    $region4: #{tpu_custom_call.1} parent=1 // pred_region
      %s14 = ssub.s32 128, 128
      %15 = vsyncadd [#allocation3], %s14
      %s17 = sshll.u32 [#allocation2], 4
      %s18 = int_to_ptr.vmem [resolvable:$true] %s17
      %20 = dma.hbm_to_vmem [thread:$0]  %s0, 128, %s18, [#allocation3]
    $region5: #{tpu_custom_call.1} parent=1 // pred_fallthru
      _
    // Predicated region
    $region6: #{tpu_custom_call.1} parent=1 // pred_check
      _
    $region7: #{tpu_custom_call.1} parent=1 // pred_check_branch
      %22 = sbr.rel (0) target = $region9
    $region8: #{tpu_custom_call.1} parent=1 // pred_region
      %s24 = ssub.s32 512, 512
      %25 = vsyncadd [#allocation6], %s24
      %s26 = sshll.u32 [#allocation5], 4
      %s27 = int_to_ptr.vmem [resolvable:$true] %s26
      %32 = dma.hbm_to_vmem [thread:$0]  %s1, 512, %s27, [#allocation6], 128, 128, 8
    $region9: #{tpu_custom_call.1} parent=1 // pred_fallthru
      _
    // Predicated region
    $region10: #{tpu_custom_call.1} parent=1 // pred_check
      _
    $region11: #{tpu_custom_call.1} parent=1 // pred_check_branch
      %34 = sbr.rel (0) target = $region13
    $region12: #{tpu_custom_call.1} parent=1 // pred_region
      _
    $region13: #{tpu_custom_call.1} parent=1 // pred_fallthru
      _
    // Predicated region
    $region14: #{tpu_custom_call.1} parent=1 // pred_check
      _
    $region15: #{tpu_custom_call.1} parent=1 // pred_check_branch
      %36 = sbr.rel (0) target = $region17
    $region16: #{tpu_custom_call.1} parent=1 // pred_region
      %37 = dma.done [#allocation3], 128
    $region17: #{tpu_custom_call.1} parent=1 // pred_fallthru
      _
    // Predicated region
    $region18: #{tpu_custom_call.1} parent=1 // pred_check
      _
    $region19: #{tpu_custom_call.1} parent=1 // pred_check_branch
      %39 = sbr.rel (0) target = $region21
    $region20: #{tpu_custom_call.1} parent=1 // pred_region
      %40 = dma.done [#allocation6], 512
    $region21: #{tpu_custom_call.1} parent=1 // pred_fallthru
      _
    %v41 = vld [vmem:[#allocation2] sm:$0xff]
    %v42 = vld [vmem:[#allocation5] sm:$0xff]
    %v43 = vld [vmem:[#allocation5 + $0x8] sm:$0xff]
    %v44 = vld [vmem:[#allocation5 + $0x10] sm:$0xff]
    %v45 = vld [vmem:[#allocation5 + $0x18] sm:$0xff]
    %v46 = vld [vmem:[%s2] sm:$0x1]
    %v48 = vlaneseq
    %v49 = vshrl.u32 %v48, 7
    %v50 = vsub.s32 0, %v49
    %v51 = vrot.slane %v46, %v50
    %vm53 = vcmask 261120
    %v55 = vsel %vm53, %v41, 0
    %57 = vmatprep.subr.mxu0 0.0
    %58 = vmatpush1.msra.mxu0 %v42
    %59 = vmatprep.subr.mxu0 0.0
    %60 = vmatpush1.msra.mxu0 %v43
    %61 = vmatprep.subr.mxu0 0.0
    %62 = vmatpush1.msra.mxu0 %v44
    %63 = vmatprep.subr.mxu0 0.0
    %64 = vmatpush1.msra.mxu0 %v45
    %65 = vmatprep.subr.mxu0 0.0
    %66 = vmatpush1.msra.mxu0 0.0
    %67 = vmatprep.subr.mxu0 0.0
    %68 = vmatpush1.msra.mxu0 0.0
    %69 = vmatprep.subr.mxu0 0.0
    %70 = vmatpush1.msra.mxu0 0.0
    %71 = vmatprep.subr.mxu0 0.0
    %72 = vmatpush1.msra.mxu0 0.0
    %73 = vmatprep.subr.mxu0 0.0
    %74 = vmatpush1.msra.mxu0 0.0
    %75 = vmatprep.subr.mxu0 0.0
    %76 = vmatpush1.msra.mxu0 0.0
    %77 = vmatprep.subr.mxu0 0.0
    %78 = vmatpush1.msra.mxu0 0.0
    %79 = vmatprep.subr.mxu0 0.0
    %80 = vmatpush1.msra.mxu0 0.0
    %81 = vmatprep.subr.mxu0 0.0
    %82 = vmatpush1.msra.mxu0 0.0
    %83 = vmatprep.subr.mxu0 0.0
    %84 = vmatpush1.msra.mxu0 0.0
    %85 = vmatprep.subr.mxu0 0.0
    %86 = vmatpush1.msra.mxu0 0.0
    %87 = vmatprep.subr.mxu0 0.0
    %88 = vmatpush1.msra.mxu0 0.0
    %89 = vmatprep.subr.mxu0 0.0
    %90 = vmatpush1.msra.mxu0 0.0
    %91 = vmatprep.subr.mxu0 0.0
    %92 = vmatpush1.msra.mxu0 0.0
    %93 = vmatprep.subr.mxu0 0.0
    %94 = vmatpush1.msra.mxu0 0.0
    %95 = vmatprep.subr.mxu0 0.0
    %96 = vmatpush1.msra.mxu0 0.0
    %97 = vmatprep.subr.mxu0 0.0
    %98 = vmatpush1.msra.mxu0 0.0
    %99 = vmatprep.subr.mxu0 0.0
    %100 = vmatpush1.msra.mxu0 0.0
    %101 = vmatprep.subr.mxu0 0.0
    %102 = vmatpush1.msra.mxu0 0.0
    %103 = vmatprep.subr.mxu0 0.0
    %104 = vmatpush1.msra.mxu0 0.0
    %105 = vmatprep.subr.mxu0 0.0
    %106 = vmatpush1.msra.mxu0 0.0
    %107 = vmatprep.subr.mxu0 0.0
    %108 = vmatpush1.msra.mxu0 0.0
    %109 = vmatprep.subr.mxu0 0.0
    %110 = vmatpush1.msra.mxu0 0.0
    %111 = vmatprep.subr.mxu0 0.0
    %112 = vmatpush1.msra.mxu0 0.0
    %113 = vmatprep.subr.mxu0 0.0
    %114 = vmatpush1.msra.mxu0 0.0
    %115 = vmatprep.subr.mxu0 0.0
    %116 = vmatpush1.msra.mxu0 0.0
    %117 = vmatprep.subr.mxu0 0.0
    %118 = vmatpush1.msra.mxu0 0.0
    %119 = vmatprep.subr.mxu0 0.0
    %120 = vmatpush1.msra.mxu0 0.0
    %121 = vmatprep.mubr.f32.mxu0 0.0
    %122 = vmatmul.mubr.f32.gmra.mrb[0].mxu0 %v55
    %v123 = vpop.f32.mrb[0].mxu0
    %v124 = vadd.f32 %v51, %v123
    %v125 = vpop.f32.mrb[0].mxu0
    %126 = vdwg.mxu0
    %vm127 = vcmp.gt.f32.partialorder %v124, 0.0
    %v128 = vmul.f32 %v124, 0.2
    %v129 = vsel %vm127, %v124, %v128
    %130 = vst [vmem:[#allocation7] sm:$0xff] %v129
    // Predicated region
    $region22: #{tpu_custom_call.1} parent=1 // pred_check
      _
    $region23: #{tpu_custom_call.1} parent=1 // pred_check_branch
      %132 = sbr.rel (0) target = $region25
    $region24: #{tpu_custom_call.1} parent=1 // pred_region
      %s134 = ssub.s32 128, 128
      %135 = vsyncadd [#allocation4], %s134
      %s137 = sshll.u32 [#allocation7], 4
      %s138 = int_to_ptr.vmem [resolvable:$true] %s137
      %140 = dma.vmem_to_hbm [thread:$0]  %s138, 128, %s3, [#allocation4]
    $region25: #{tpu_custom_call.1} parent=1 // pred_fallthru
      _
    // Predicated region
    $region26: #{tpu_custom_call.1} parent=1 // pred_check
      _
    $region27: #{tpu_custom_call.1} parent=1 // pred_check_branch
      %142 = sbr.rel (0) target = $region29
    $region28: #{tpu_custom_call.1} parent=1 // pred_region
      %143 = dma.done [#allocation4], 128
    $region29: #{tpu_custom_call.1} parent=1 // pred_fallthru
      _
    %144 = vsyncpa [#allocation3], 1
    %145 = vsyncpa [#allocation6], 1
    %146 = vsyncpa [#allocation4], 1

</llo_original>
